<compile_context>
chip_gen: v7x
topology: tpu7x:2x2x1
jax: 0.10.0
libtpu: 0.0.40
codegen_flags: <defaults>
</compile_context>

<pallas_src>
import jax
import jax.numpy as jnp
from jax.experimental import pallas as pl
from jax.experimental.pallas import tpu as pltpu


# ---------------------------------------------------------------------------
# Helpers
# ---------------------------------------------------------------------------
def _vmem_limit_bytes(frac=0.75, default=64 * 1024 * 1024):
    """Scoped-VMEM limit: 0.75 x physical capacity (v5e/v6e 128 MiB, v7x 64 MiB)."""
    try:
        cap = pltpu.get_tpu_info().vmem_capacity_bytes
        return min(int(cap * frac), 100 * 1024 * 1024)
    except Exception:
        return default


def _choose_tile(n, target, mults=(16, 8)):
    """Largest divisor of n <= target that is a multiple of one of `mults`
    (tried in preference order); falls back to n (full dimension)."""
    target = min(int(target), n)
    if target >= n:
        return n
    for m in mults:
        for t in range(target, m - 1, -1):
            if n % t == 0 and t % m == 0:
                return t
    return n


def _pass2_tiles(HW, C, vmem_limit, tq_target, tk_target, kv_resident):
    """VMEM-budget-aware attention tiling (v7x: 48 MiB scoped budget)."""
    if kv_resident is None:
        # K + V bf16 tiles, double-buffered across the batch axis by the pipeline.
        kv_resident = (8 * HW * C) <= int(0.4 * vmem_limit)
    tk = HW if kv_resident else _choose_tile(HW, tk_target, (128, 16, 8))
    tq = _choose_tile(HW, tq_target, (16, 8))
    # Keep the f32 (tq, tk) score tile (plus its exp copy) within budget.
    score_budget = max(2 * 1024 * 1024, vmem_limit // 8)
    while tq > 128 and 4 * tq * tk > score_budget:
        new_tq = _choose_tile(HW, max(tq // 2, 128), (16, 8))
        if new_tq >= tq:
            break
        tq = new_tq
    return tq, tk


# ---------------------------------------------------------------------------
# Pass 0: per-(batch, channel) sum and sum-of-squares, tiled over HW
# ---------------------------------------------------------------------------
def stats_kernel(x_ref, s1_ref, s2_ref):
    @pl.when(pl.program_id(1) == 0)
    def _init():
        s1_ref[...] = jnp.zeros(s1_ref.shape, s1_ref.dtype)
        s2_ref[...] = jnp.zeros(s2_ref.shape, s2_ref.dtype)

    x = x_ref[...]                                       # (trow, C) f32
    s1_ref[...] += jnp.sum(x, axis=0, keepdims=True)     # (1, C)
    s2_ref[...] += jnp.sum(x * x, axis=0, keepdims=True)


# ---------------------------------------------------------------------------
# Pass 1: normalize (folded scale/shift) + q/k/v projections, tiled over HW
# ---------------------------------------------------------------------------
def norm_qkv_kernel(x_ref, scale_ref, shift_ref, w_ref, b_ref, q_ref, k_ref, v_ref):
    # GroupNorm affine already folded into per-channel scale/shift (per batch element).
    hn = (x_ref[...] * scale_ref[...] + shift_ref[...]).astype(jnp.bfloat16)
    # Three direct MXU dots written straight into q/k/v refs (no f32 qkv intermediate,
    # no slice copies).  Attention scale is pre-folded into Wq/bq.
    for out_ref, s in ((q_ref, 0), (k_ref, 1), (v_ref, 2)):
        y = jnp.dot(hn, w_ref[s], preferred_element_type=jnp.float32) + b_ref[s]
        out_ref[...] = y.astype(jnp.bfloat16)


# ---------------------------------------------------------------------------
# Pass 2: flash attention (online softmax over k/v tiles) + proj + residual
# ---------------------------------------------------------------------------
def flash_attn_proj_kernel(x_ref, q_ref, k_ref, v_ref, wp_ref, bp_ref, o_ref,
                           m_sc, l_sc, acc_sc):
    j = pl.program_id(2)

    @pl.when(j == 0)
    def _init():
        m_sc[...] = jnp.full(m_sc.shape, -jnp.inf, dtype=m_sc.dtype)
        l_sc[...] = jnp.zeros(l_sc.shape, dtype=l_sc.dtype)
        acc_sc[...] = jnp.zeros(acc_sc.shape, dtype=acc_sc.dtype)

    q = q_ref[...]                                       # (tq, C) bf16 (pre-scaled)
    k = k_ref[...]                                       # (tk, C) bf16
    # q @ k^T via dot_general contracting the channel (lane) axis — Mosaic feeds the
    # transposed operand to the MXU directly, no explicit k transpose copy.
    s = jax.lax.dot_general(q, k, dimension_numbers=(((1,), (1,)), ((), ())),
                            preferred_element_type=jnp.float32)   # (tq, tk) f32

    m_prev = m_sc[...]
    m_new = jnp.maximum(m_prev, jnp.max(s, axis=-1, keepdims=True))
    alpha = jnp.exp(m_prev - m_new)
    p = jnp.exp(s - m_new)
    l_sc[...] = alpha * l_sc[...] + jnp.sum(p, axis=-1, keepdims=True)
    acc_sc[...] = alpha * acc_sc[...] + jnp.dot(p.astype(jnp.bfloat16), v_ref[...],
                                                preferred_element_type=jnp.float32)
    m_sc[...] = m_new

    @pl.when(j == pl.num_programs(2) - 1)
    def _finalize():
        h = acc_sc[...] * pl.reciprocal(l_sc[...], approx=True)   # EUP reciprocal
        proj = jnp.dot(h.astype(jnp.bfloat16), wp_ref[...],
                       preferred_element_type=jnp.float32) + bp_ref[...]
        o_ref[...] = x_ref[...] + proj                            # residual in f32


# ---------------------------------------------------------------------------
# Wrapper
# ---------------------------------------------------------------------------
def attn_block(x_nchw, params, num_groups=32, *, row_target=512,
               tq_target=512, tk_target=1024, kv_resident=None, eps=1e-6):
    B, C, H, W = x_nchw.shape
    HW = H * W
    G = num_groups
    assert C % G == 0
    Cg = C // G

    # NCHW -> (B, HW, C)
    # TODO(synk): keep the surrounding model channels-last to avoid these HBM transposes.
    x = jnp.transpose(x_nchw.reshape(B, C, HW), (0, 2, 1)).astype(jnp.float32)

    vmem_limit = _vmem_limit_bytes()

    # ---- pass 0: per-(batch, channel) sums, tiled over HW -------------------
    trow = _choose_tile(HW, row_target, (16, 8))
    nrow = HW // trow
    s1, s2 = pl.pallas_call(
        stats_kernel,
        out_shape=[jax.ShapeDtypeStruct((B, 1, C), jnp.float32)] * 2,
        grid=(B, nrow),
        in_specs=[pl.BlockSpec((None, trow, C), lambda b, r: (b, r, 0))],
        out_specs=[pl.BlockSpec((None, 1, C), lambda b, r: (b, 0, 0))] * 2,
        compiler_params=pltpu.CompilerParams(
            dimension_semantics=("parallel", "arbitrary"),
            vmem_limit_bytes=vmem_limit),
    )(x)

    # Tiny (B, C) group reduce + fold of GroupNorm affine into per-channel scale/shift.
    cnt = float(HW * Cg)
    mean_g = s1.reshape(B, G, Cg).sum(axis=2) / cnt               # (B, G)
    ex2_g = s2.reshape(B, G, Cg).sum(axis=2) / cnt
    var_g = jnp.maximum(ex2_g - mean_g * mean_g, 0.0)
    rstd_g = jax.lax.rsqrt(var_g + eps)
    mean_c = jnp.repeat(mean_g, Cg, axis=1)                       # (B, C)
    rstd_c = jnp.repeat(rstd_g, Cg, axis=1)
    gamma = params["gamma"].astype(jnp.float32)
    beta = params["beta"].astype(jnp.float32)
    gn_scale = (rstd_c * gamma[None, :]).reshape(B, 1, C)
    gn_shift = (beta[None, :] - mean_c * rstd_c * gamma[None, :]).reshape(B, 1, C)

    # Weights: (out, in) -> (in, out); attention scale folded into the q projection.
    attn_scale = float(C) ** (-0.5)
    wq = params["wq"].astype(jnp.float32).T * attn_scale
    wk = params["wk"].astype(jnp.float32).T
    wv = params["wv"].astype(jnp.float32).T
    wqkv = jnp.stack([wq, wk, wv], axis=0).astype(jnp.bfloat16)   # (3, C, C)
    bqkv = jnp.stack([params["bq"].astype(jnp.float32) * attn_scale,
                      params["bk"].astype(jnp.float32),
                      params["bv"].astype(jnp.float32)], axis=0).reshape(3, 1, C)
    wp = params["wp"].astype(jnp.float32).T.astype(jnp.bfloat16)  # (C, C)
    bp = params["bp"].reshape(1, C).astype(jnp.float32)

    # ---- pass 1: normalize + q/k/v projections (fully parallel grid) --------
    q, k, v = pl.pallas_call(
        norm_qkv_kernel,
        out_shape=[jax.ShapeDtypeStruct((B, HW, C), jnp.bfloat16)] * 3,
        grid=(B, nrow),
        in_specs=[
            pl.BlockSpec((None, trow, C), lambda b, r: (b, r, 0)),   # x
            pl.BlockSpec((None, 1, C), lambda b, r: (b, 0, 0)),      # GN scale
            pl.BlockSpec((None, 1, C), lambda b, r: (b, 0, 0)),      # GN shift
            pl.BlockSpec((3, C, C), lambda b, r: (0, 0, 0)),         # Wq/Wk/Wv (bf16)
            pl.BlockSpec((3, 1, C), lambda b, r: (0, 0, 0)),         # bq/bk/bv (f32)
        ],
        out_specs=[pl.BlockSpec((None, trow, C), lambda b, r: (b, r, 0))] * 3,
        compiler_params=pltpu.CompilerParams(
            dimension_semantics=("parallel", "parallel"),
            vmem_limit_bytes=vmem_limit),
    )(x, gn_scale, gn_shift, wqkv, bqkv)

    # ---- pass 2: flash attention + output projection + residual -------------
    tq, tk = _pass2_tiles(HW, C, vmem_limit, tq_target, tk_target, kv_resident)
    nq, nk = HW // tq, HW // tk
    # With nk == 1 the k/v block index is constant across the q-tile axis, so K/V are
    # DMA'd into VMEM once per batch element (no refetch).
    # TODO(synk): if still DMA-exposed for huge HW, add pipeline_mode=pl.Buffered(3)
    # on the k/v specs and/or emit a bf16 output.

    out = pl.pallas_call(
        flash_attn_proj_kernel,
        out_shape=jax.ShapeDtypeStruct((B, HW, C), jnp.float32),
        grid=(B, nq, nk),
        in_specs=[
            pl.BlockSpec((None, tq, C), lambda b, i, j: (b, i, 0)),  # x (residual, f32)
            pl.BlockSpec((None, tq, C), lambda b, i, j: (b, i, 0)),  # q tile (bf16)
            pl.BlockSpec((None, tk, C), lambda b, i, j: (b, j, 0)),  # k tile (bf16)
            pl.BlockSpec((None, tk, C), lambda b, i, j: (b, j, 0)),  # v tile (bf16)
            pl.BlockSpec((C, C), lambda b, i, j: (0, 0)),            # Wp (bf16)
            pl.BlockSpec((1, C), lambda b, i, j: (0, 0)),            # bp (f32)
        ],
        out_specs=pl.BlockSpec((None, tq, C), lambda b, i, j: (b, i, 0)),
        scratch_shapes=[
            pltpu.VMEM((tq, 1), jnp.float32),   # running max m
            pltpu.VMEM((tq, 1), jnp.float32),   # running denom l
            pltpu.VMEM((tq, C), jnp.float32),   # running accumulator
        ],
        compiler_params=pltpu.CompilerParams(
            dimension_semantics=("parallel", "parallel", "arbitrary"),
            vmem_limit_bytes=vmem_limit),
    )(x, q, k, v, wp, bp)

    # (B, HW, C) -> NCHW
    return jnp.transpose(out, (0, 2, 1)).reshape(B, C, H, W)


# ---------------------------------------------------------------------------
# Pure-JAX reference mirroring the PyTorch forward (NCHW)
# ---------------------------------------------------------------------------
def ref_attn_block(x, params, num_groups=32):
    B, C, H, W = x.shape
    G = num_groups
    Cg = C // G
    xr = x.reshape(B, G, Cg, H, W)
    mean = xr.mean(axis=(2, 3, 4), keepdims=True)
    var = xr.var(axis=(2, 3, 4), keepdims=True)
    hn = ((xr - mean) / jnp.sqrt(var + 1e-6)).reshape(B, C, H, W)
    hn = hn * params["gamma"][None, :, None, None] + params["beta"][None, :, None, None]

    def conv1x1(h, w, b):
        return jnp.einsum("oc,bchw->bohw", w, h) + b[None, :, None, None]

    q = conv1x1(hn, params["wq"], params["bq"])
    k = conv1x1(hn, params["wk"], params["bk"])
    v = conv1x1(hn, params["wv"], params["bv"])
    b, c, h, w = q.shape
    q = q.reshape(b, c, h * w).transpose(0, 2, 1)          # (b, hw, c)
    k = k.reshape(b, c, h * w)                             # (b, c, hw)
    w_ = jnp.einsum("bic,bcj->bij", q, k) * (float(c) ** (-0.5))
    w_ = jax.nn.softmax(w_, axis=2)
    v = v.reshape(b, c, h * w)
    h_ = jnp.einsum("bcj,bij->bci", v, w_).reshape(b, c, h, w)
    h_ = conv1x1(h_, params["wp"], params["bp"])
    return x + h_


def make_params(key, C):
    ks = jax.random.split(key, 10)
    return {
        "gamma": 1.0 + 0.1 * jax.random.normal(ks[0], (C,), jnp.float32),
        "beta": 0.1 * jax.random.normal(ks[1], (C,), jnp.float32),
        "wq": 0.1 * jax.random.normal(ks[2], (C, C), jnp.float32),
        "bq": 0.1 * jax.random.normal(ks[3], (C,), jnp.float32),
        "wk": 0.1 * jax.random.normal(ks[4], (C, C), jnp.float32),
        "bk": 0.1 * jax.random.normal(ks[5], (C,), jnp.float32),
        "wv": 0.1 * jax.random.normal(ks[6], (C, C), jnp.float32),
        "bv": 0.1 * jax.random.normal(ks[7], (C,), jnp.float32),
        "wp": 0.1 * jax.random.normal(ks[8], (C, C), jnp.float32),
        "bp": 0.1 * jax.random.normal(ks[9], (C,), jnp.float32),
    }


if __name__ == "__main__":
    key = jax.random.PRNGKey(0)

    # Test 1: GroupNorm(num_groups=32) requires C % 32 == 0 -> smallest C = 32.
    # Auto tile policy: KV-resident (nk = 1), single-tile rows.
    B, C, H, W = 2, 32, 8, 8
    kx, kp, key = jax.random.split(key, 3)
    x = jax.random.normal(kx, (B, C, H, W), jnp.float32)
    params = make_params(kp, C)
    out = jax.block_until_ready(attn_block(x, params))
    ref = ref_attn_block(x, params)
    assert out.shape == (B, C, H, W)
    assert jnp.allclose(out, ref, atol=5e-2, rtol=5e-2), (
        f"max abs err = {jnp.max(jnp.abs(out - ref))}")   # bf16 MXU tolerance

    # Test 2: force the multi-tile paths (stats/norm grid (1, 4), attention grid
    # (1, 4, 4)) to exercise the online softmax and the HW-tiled GroupNorm stats.
    B, C, H, W = 1, 64, 16, 16
    kx, kp, key = jax.random.split(key, 3)
    x = jax.random.normal(kx, (B, C, H, W), jnp.float32)
    params = make_params(kp, C)
    out = jax.block_until_ready(attn_block(x, params, row_target=64,
                                           tq_target=64, tk_target=64,
                                           kv_resident=False))
    ref = ref_attn_block(x, params)
    assert jnp.allclose(out, ref, atol=5e-2, rtol=5e-2), (
        f"max abs err = {jnp.max(jnp.abs(out - ref))}")

    print("KERNEL_OK")
</pallas_src>

<mosaic_0001>
module attributes {stable_mosaic.version = 11 : i64} {
  func.func @stats_kernel(%arg0: i32, %arg1: i32, %arg2: memref<1x64x32xf32, #tpu.memory_space<vmem>>, %arg3: memref<1x1x32xf32, #tpu.memory_space<vmem>>, %arg4: memref<1x1x32xf32, #tpu.memory_space<vmem>>) attributes {dimension_semantics = [#tpu.dimension_semantics<parallel>, #tpu.dimension_semantics<arbitrary>], iteration_bounds = array<i64: 2, 1>, scalar_prefetch = 0 : i64, scratch_operands = 0 : i64, tpu.core_type = #tpu.core_type<tc>, window_params = [{transform_indices = @transform_0, window_bounds = array<i64: 1, 64, 32>}, {transform_indices = @transform_1, window_bounds = array<i64: 1, 1, 32>}, {transform_indices = @transform_2, window_bounds = array<i64: 1, 1, 32>}]} {
    %c0_i32 = arith.constant 0 : i32
    %0 = arith.cmpi eq, %arg1, %c0_i32 : i32
    %1 = arith.extui %0 : i1 to i32
    %c0_i32_0 = arith.constant 0 : i32
    %2 = arith.cmpi ne, %1, %c0_i32_0 : i32
    scf.if %2 {
      %cst_16 = arith.constant 0.000000e+00 : f32
      %22 = vector.broadcast %cst_16 : f32 to vector<1x32xf32>
      %c0_17 = arith.constant 0 : index
      %c0_18 = arith.constant 0 : index
      %c0_19 = arith.constant 0 : index
      %23 = vector.load %arg3[%c0_17, %c0_18, %c0_19] : memref<1x1x32xf32, #tpu.memory_space<vmem>>, vector<1x1x32xf32>
      %24 = vector.shape_cast %23 : vector<1x1x32xf32> to vector<1x32xf32>
      %25 = vector.shape_cast %22 : vector<1x32xf32> to vector<1x1x32xf32>
      tpu.vector_store %arg3[%c0_17, %c0_18, %c0_19], %25 {strides = array<i32>} : memref<1x1x32xf32, #tpu.memory_space<vmem>>, vector<1x1x32xf32>,
      %cst_20 = arith.constant 0.000000e+00 : f32
      %26 = vector.broadcast %cst_20 : f32 to vector<1x32xf32>
      %c0_21 = arith.constant 0 : index
      %c0_22 = arith.constant 0 : index
      %c0_23 = arith.constant 0 : index
      %27 = vector.load %arg4[%c0_21, %c0_22, %c0_23] : memref<1x1x32xf32, #tpu.memory_space<vmem>>, vector<1x1x32xf32>
      %28 = vector.shape_cast %27 : vector<1x1x32xf32> to vector<1x32xf32>
      %29 = vector.shape_cast %26 : vector<1x32xf32> to vector<1x1x32xf32>
      tpu.vector_store %arg4[%c0_21, %c0_22, %c0_23], %29 {strides = array<i32>} : memref<1x1x32xf32, #tpu.memory_space<vmem>>, vector<1x1x32xf32>,
    } else {
    }
    %c0 = arith.constant 0 : index
    %c0_1 = arith.constant 0 : index
    %c0_2 = arith.constant 0 : index
    %3 = vector.load %arg2[%c0, %c0_1, %c0_2] : memref<1x64x32xf32, #tpu.memory_space<vmem>>, vector<1x64x32xf32>
    %4 = vector.shape_cast %3 : vector<1x64x32xf32> to vector<64x32xf32>
    %c0_3 = arith.constant 0 : index
    %c0_4 = arith.constant 0 : index
    %c0_5 = arith.constant 0 : index
    %5 = vector.load %arg3[%c0_3, %c0_4, %c0_5] : memref<1x1x32xf32, #tpu.memory_space<vmem>>, vector<1x1x32xf32>
    %6 = vector.shape_cast %5 : vector<1x1x32xf32> to vector<1x32xf32>
    %cst = arith.constant dense<0.000000e+00> : vector<32xf32>
    %7 = vector.multi_reduction <add>, %4, %cst [0] : vector<64x32xf32> to vector<32xf32>
    %8 = vector.shape_cast %7 : vector<32xf32> to vector<1x32xf32>
    %9 = arith.addf %6, %8 : vector<1x32xf32>
    %c0_6 = arith.constant 0 : index
    %c0_7 = arith.constant 0 : index
    %c0_8 = arith.constant 0 : index
    %10 = vector.load %arg3[%c0_6, %c0_7, %c0_8] : memref<1x1x32xf32, #tpu.memory_space<vmem>>, vector<1x1x32xf32>
    %11 = vector.shape_cast %10 : vector<1x1x32xf32> to vector<1x32xf32>
    %12 = vector.shape_cast %9 : vector<1x32xf32> to vector<1x1x32xf32>
    tpu.vector_store %arg3[%c0_6, %c0_7, %c0_8], %12 {strides = array<i32>} : memref<1x1x32xf32, #tpu.memory_space<vmem>>, vector<1x1x32xf32>,
    %c0_9 = arith.constant 0 : index
    %c0_10 = arith.constant 0 : index
    %c0_11 = arith.constant 0 : index
    %13 = vector.load %arg4[%c0_9, %c0_10, %c0_11] : memref<1x1x32xf32, #tpu.memory_space<vmem>>, vector<1x1x32xf32>
    %14 = vector.shape_cast %13 : vector<1x1x32xf32> to vector<1x32xf32>
    %15 = arith.mulf %4, %4 : vector<64x32xf32>
    %cst_12 = arith.constant dense<0.000000e+00> : vector<32xf32>
    %16 = vector.multi_reduction <add>, %15, %cst_12 [0] : vector<64x32xf32> to vector<32xf32>
    %17 = vector.shape_cast %16 : vector<32xf32> to vector<1x32xf32>
    %18 = arith.addf %14, %17 : vector<1x32xf32>
    %c0_13 = arith.constant 0 : index
    %c0_14 = arith.constant 0 : index
    %c0_15 = arith.constant 0 : index
    %19 = vector.load %arg4[%c0_13, %c0_14, %c0_15] : memref<1x1x32xf32, #tpu.memory_space<vmem>>, vector<1x1x32xf32>
    %20 = vector.shape_cast %19 : vector<1x1x32xf32> to vector<1x32xf32>
    %21 = vector.shape_cast %18 : vector<1x32xf32> to vector<1x1x32xf32>
    tpu.vector_store %arg4[%c0_13, %c0_14, %c0_15], %21 {strides = array<i32>} : memref<1x1x32xf32, #tpu.memory_space<vmem>>, vector<1x1x32xf32>,
    return
  }
  func.func @transform_0(%arg0: i32, %arg1: i32) -> (i32, i32, i32) {
    %c0_i32 = arith.constant 0 : i32
    %c0_i32_0 = arith.constant 0 : i32
    return %arg0, %arg1, %c0_i32 : i32, i32, i32
  }
  func.func @transform_1(%arg0: i32, %arg1: i32) -> (i32, i32, i32) {
    %c0_i32 = arith.constant 0 : i32
    %c0_i32_0 = arith.constant 0 : i32
    %c0_i32_1 = arith.constant 0 : i32
    return %arg0, %c0_i32, %c0_i32_0 : i32, i32, i32
  }
  func.func @transform_2(%arg0: i32, %arg1: i32) -> (i32, i32, i32) {
    %c0_i32 = arith.constant 0 : i32
    %c0_i32_0 = arith.constant 0 : i32
    %c0_i32_1 = arith.constant 0 : i32
    return %arg0, %c0_i32, %c0_i32_0 : i32, i32, i32
  }
}

</mosaic_0001>

<llo_original>
// kernel: tpu_custom_call.1
$region0: #{tpu_custom_call.1}
  #allocation0 [shape = 'u32[]', space=smem, size = 0x4, offset = 0x4, fixed_abs, tag = 'smem constant byte address 0x4 - core index']
  #allocation1 [shape = 'u32[144,128]{1,0:T(1,128)}', space=vmem, size = 0x12000, scoped, tag = 'internal scratch']
  %s0 = inlined_call_operand.hbm [shape: f32[2,64,32], index: 0, kind: input, shape index: {}]
  %s1 = inlined_call_operand.hbm [shape: f32[2,1,32], index: 1, kind: output, shape index: {0}]
  %s2 = inlined_call_operand.hbm [shape: f32[2,1,32], index: 2, kind: output, shape index: {1}]
  %3 = xla_tuple %s1, %s2
  %s4 = sld [smem:[#allocation0]]
  $region53: #{tpu_custom_call.1} parent=0
    _
  %s6 = ssub.s32 1, %s4
  %s7 = scalar_select 0, %s6, %s4
  $region1: #{tpu_custom_call.1} parent=0
    #allocation2 [shape = 'u8[65536]{0}', space=vmem, size = 0x10000, scoped, tag = 'input window, operand 0']
    #allocation3 [shape = 's32[2]{0}', space=sflag, size = 0x8, scoped, tag = 'scoped memory for tpu_custom_call.1']
    #allocation4 [shape = 's32[2]{0}', space=sflag, size = 0x8, scoped, tag = 'scoped memory for tpu_custom_call.1']
    #allocation5 [shape = 'u8[1024]{0}', space=vmem, size = 0x400, scoped, tag = 'output window, operand 0']
    #allocation6 [shape = 'u8[1024]{0}', space=vmem, size = 0x400, scoped, tag = 'output window, operand 1']
    #allocation7 [shape = 's32[2]{0}', space=sflag, size = 0x8, scoped, tag = 'scoped memory for tpu_custom_call.1']
    %8 = vsyncpa [#allocation3], 0
    %s9 = scalar_lea.sflag [#allocation3], 1
    %10 = vsyncpa %s9, 0
    %11 = vsyncpa [#allocation4], 0
    %s12 = scalar_lea.sflag [#allocation4], 1
    %13 = vsyncpa %s12, 0
    %14 = vsyncpa [#allocation7], 0
    %s15 = scalar_lea.sflag [#allocation7], 1
    %16 = vsyncpa %s15, 0
    loop: start=0, step=1, limit=4
    $region2: #{tpu_custom_call.1} parent=1 // loop_pre_header
      _
    $region3: #{tpu_custom_call.1} parent=1 // loop_header
      %s18 = sphi 0, %s22
      %p19 = scmp.ge.s32.totalorder %s18, 4
      %s25 = sphi 0, %s37
      %s26 = sphi 0, %s33
      %s27 = sphi 0, %s25
      %s28 = sphi 0, %s26
      %s29 = sphi 0, %s27
      %s30 = sphi 0, %s28
      %s42 = sphi 0, %s44
      %s45 = sphi 0, %s42
      %s46 = sphi 0, %s45
      %s62 = sphi 0, %s46
      %s68 = sphi 0, %s70
      %s71 = sphi 0, %s68
      %s72 = sphi 0, %s71
      %s88 = sphi 0, %s72
      %s94 = sphi 0, %s96
      %s97 = sphi 0, %s94
      %s98 = sphi 0, %s97
      %s114 = sphi 0, %s98
    $region4: #{tpu_custom_call.1} parent=1 // loop_header_branch
      %21 = sbr.rel (%p19) target = $region8
    $region5: #{tpu_custom_call.1} parent=1 // loop_body
      %s23 = ssub.s32 %s18, 1
      %s24 = ssub.s32 %s18, 2
      %s31 = sadd.s32 1, %s26
      %p32 = scmp.ge.s32.totalorder %s31, 1
      %s33 = scalar_select %p32, 0, %s31
      %s34 = sadd.s32 1, %s25
      %s35 = scalar_select %p32, %s34, %s25
      %p36 = scmp.ge.s32.totalorder %s35, 2
      %s37 = scalar_select %p36, 0, %s35
      %s38 = ssub.s32 %s25, %s37
      %s39 = ssub.s32 %s26, %s33
      %s40 = sor.u32 %s38, %s39
      %p41 = scmp.eq.s32.totalorder %s40, 0
      %s43 = sadd.s32 %s42, 1
      %s44 = scalar_select %p41, %s42, %s43
      %p47 = pneg %p41
      %p48 = scmp.eq.s32.totalorder %s18, 1
      %p49 = por %p47, %p48
      %p50 = scmp.ne.s32.totalorder %s42, %s45
      %p51 = scmp.eq.s32.totalorder %s18, 0
      %p52 = por %p50, %p51
      %p53 = scmp.ne.s32.totalorder %s42, %s45
      %p54 = scmp.eq.s32.totalorder %s23, 1
      %p55 = por %p53, %p54
      %p56 = scmp.ne.s32.totalorder %s45, %s46
      %p57 = scmp.eq.s32.totalorder %s23, 0
      %p58 = por %p56, %p57
      %p59 = scmp.ne.s32.totalorder %s45, %s46
      %p60 = scmp.eq.s32.totalorder %s24, 1
      %p61 = por %p59, %p60
      %p63 = scmp.ne.s32.totalorder %s46, %s62
      %p64 = scmp.eq.s32.totalorder %s24, 0
      %p65 = por %p63, %p64
      %s66 = ssub.s32 %s25, %s37
      %p67 = scmp.eq.s32.totalorder %s66, 0
      %s69 = sadd.s32 %s68, 1
      %s70 = scalar_select %p67, %s68, %s69
      %p73 = pneg %p67
      %p74 = scmp.eq.s32.totalorder %s18, 1
      %p75 = por %p73, %p74
      %p76 = scmp.ne.s32.totalorder %s68, %s71
      %p77 = scmp.eq.s32.totalorder %s18, 0
      %p78 = por %p76, %p77
      %p79 = scmp.ne.s32.totalorder %s68, %s71
      %p80 = scmp.eq.s32.totalorder %s23, 1
      %p81 = por %p79, %p80
      %p82 = scmp.ne.s32.totalorder %s71, %s72
      %p83 = scmp.eq.s32.totalorder %s23, 0
      %p84 = por %p82, %p83
      %p85 = scmp.ne.s32.totalorder %s71, %s72
      %p86 = scmp.eq.s32.totalorder %s24, 1
      %p87 = por %p85, %p86
      %p89 = scmp.ne.s32.totalorder %s72, %s88
      %p90 = scmp.eq.s32.totalorder %s24, 0
      %p91 = por %p89, %p90
      %s92 = ssub.s32 %s25, %s37
      %p93 = scmp.eq.s32.totalorder %s92, 0
      %s95 = sadd.s32 %s94, 1
      %s96 = scalar_select %p93, %s94, %s95
      %p99 = pneg %p93
      %p100 = scmp.eq.s32.totalorder %s18, 1
      %p101 = por %p99, %p100
      %p102 = scmp.ne.s32.totalorder %s94, %s97
      %p103 = scmp.eq.s32.totalorder %s18, 0
      %p104 = por %p102, %p103
      %p105 = scmp.ne.s32.totalorder %s94, %s97
      %p106 = scmp.eq.s32.totalorder %s23, 1
      %p107 = por %p105, %p106
      %p108 = scmp.ne.s32.totalorder %s97, %s98
      %p109 = scmp.eq.s32.totalorder %s23, 0
      %p110 = por %p108, %p109
      %p111 = scmp.ne.s32.totalorder %s97, %s98
      %p112 = scmp.eq.s32.totalorder %s24, 1
      %p113 = por %p111, %p112
      %p115 = scmp.ne.s32.totalorder %s98, %s114
      %p116 = scmp.eq.s32.totalorder %s24, 0
      %p117 = por %p115, %p116
      %p118 = scmp.le.s32.totalorder 1, %s18
      %p119 = scmp.lt.s32.totalorder %s18, 3
      %p120 = pnand %p118, %p119
      %p121 = pneg %p120
      // Predicated region
      $region9: #{tpu_custom_call.1} parent=5 // pred_check
        _
      $region10: #{tpu_custom_call.1} parent=5 // pred_check_branch
        %123 = sbr.rel (%p120) target = $region12
      $region11: #{tpu_custom_call.1} parent=5 // pred_region
        %s124 = ssub.s32 %s18, 1
      $region12: #{tpu_custom_call.1} parent=5 // pred_fallthru
        _
      %p125 = scmp.lt.s32.totalorder %s18, 2
      // Predicated region
      $region13: #{tpu_custom_call.1} parent=5 // pred_check
        %p126 = pneg %p125
      $region14: #{tpu_custom_call.1} parent=5 // pred_check_branch
        %128 = sbr.rel (%p126) target = $region16
      $region15: #{tpu_custom_call.1} parent=5 // pred_region
        // Predicated region
        $region17: #{tpu_custom_call.1} parent=15 // pred_check
          %p129 = pneg %p52
        $region18: #{tpu_custom_call.1} parent=15 // pred_check_branch
          %131 = sbr.rel (%p129) target = $region20
        $region19: #{tpu_custom_call.1} parent=15 // pred_region
          %s132 = sand.u32 %s42, 1
          %s133 = scalar_lea.sflag [#allocation3], %s132
          %s134 = sand.u32 %s42, 1
          %s135 = smul.addr %s134, 64
          %s136 = scalar_lea.vmem [#allocation2], %s135
          %s137 = smul.u32 8, %s26
          %s139 = ssub.s32 1024, 1024
          %140 = vsyncadd %s133, %s139
          %s141 = smul.addr %s25, 8
          %s142 = sadd.s32 %s137, %s141
          %s143 = smul.addr %s142, 128
          %s144 = scalar_lea.hbm %s0, %s143
          %s145 = sshll.u32 %s136, 4
          %s146 = int_to_ptr.vmem [resolvable:$true] %s145
          %151 = dma.hbm_to_vmem [thread:$0]  %s144, 1024, %s146, %s133, 128, 128, 8
        $region20: #{tpu_custom_call.1} parent=15 // pred_fallthru
          _
      $region16: #{tpu_custom_call.1} parent=5 // pred_fallthru
        _
      %p152 = scmp.le.s32.totalorder 1, %s18
      %p153 = scmp.lt.s32.totalorder %s18, 3
      %p154 = pnand %p152, %p153
      %p155 = pneg %p154
      // Predicated region
      $region21: #{tpu_custom_call.1} parent=5 // pred_check
        _
      $region22: #{tpu_custom_call.1} parent=5 // pred_check_branch
        %157 = sbr.rel (%p154) target = $region24
      $region23: #{tpu_custom_call.1} parent=5 // pred_region
        %s158 = ssub.s32 %s18, 1
        %s159 = sand.u32 %s45, 1
        %s160 = scalar_lea.sflag [#allocation3], %s159
        %s161 = sand.u32 %s45, 1
        %s162 = smul.addr %s161, 64
        %s163 = scalar_lea.vmem [#allocation2], %s162
        // Predicated region
        $region25: #{tpu_custom_call.1} parent=23 // pred_check
          %p164 = pneg %p58
        $region26: #{tpu_custom_call.1} parent=23 // pred_check_branch
          %166 = sbr.rel (%p164) target = $region28
        $region27: #{tpu_custom_call.1} parent=23 // pred_region
          %167 = dma.done %s160, 1024
        $region28: #{tpu_custom_call.1} parent=23 // pred_fallthru
          _
        %s168 = sand.u32 %s45, 1
        %s169 = scalar_lea.sflag [#allocation3], %s168
        %s170 = sand.u32 %s45, 1
        %s171 = smul.addr %s170, 64
        %s172 = scalar_lea.vmem [#allocation2], %s171
        %p173 = pneg %p58
        %p174 = pneg %p55
        %p175 = pneg %p84
        %p176 = pneg %p81
        %s177 = sand.u32 %s71, 1
        %s178 = scalar_lea.sflag [#allocation4], %s177
        %s179 = sand.u32 %s71, 1
        %s180 = scalar_lea.vmem [#allocation5], %s179
        %p181 = pneg %p110
        %p182 = pneg %p107
        %s183 = sand.u32 %s97, 1
        %s184 = scalar_lea.sflag [#allocation7], %s183
        %s185 = sand.u32 %s97, 1
        %s186 = scalar_lea.vmem [#allocation6], %s185
        %s187 = smul.u32 8, %s28
        %p188 = scmp.eq.s32.totalorder %s28, 0
        // Predicated region
        $region29: #{tpu_custom_call.1} parent=23 // pred_check
          %p189 = pneg %p188
        $region30: #{tpu_custom_call.1} parent=23 // pred_check_branch
          %191 = sbr.rel (%p189) target = $region32
        $region31: #{tpu_custom_call.1} parent=23 // pred_region
          %vm192 = vcmask 253952
          %193 = vst.msk [vmem:[%s180] sm:$0x1] %vm192, 0.0
          %194 = vst.msk [vmem:[%s186] sm:$0x1] %vm192, 0.0
        $region32: #{tpu_custom_call.1} parent=23 // pred_fallthru
          _
        %v195 = vld [vmem:[%s163] sm:$0xff]
        %v196 = vld [vmem:[%s163 + $0x8] sm:$0xff]
        %v197 = vld [vmem:[%s163 + $0x10] sm:$0xff]
        %v198 = vld [vmem:[%s163 + $0x18] sm:$0xff]
        %v199 = vld [vmem:[%s163 + $0x20] sm:$0xff]
        %v200 = vld [vmem:[%s163 + $0x28] sm:$0xff]
        %v201 = vld [vmem:[%s163 + $0x30] sm:$0xff]
        %v202 = vld [vmem:[%s163 + $0x38] sm:$0xff]
        %v203 = vld [vmem:[%s180] sm:$0x1]
        %vm204 = vcmask 261120
        %v205 = vsel %vm204, %v195, 0.0
        %v206 = vsel %vm204, %v196, 0.0
        %v207 = vadd.f32 %v205, %v206
        %v208 = vsel %vm204, %v197, 0.0
        %v209 = vadd.f32 %v207, %v208
        %v210 = vsel %vm204, %v198, 0.0
        %v211 = vadd.f32 %v209, %v210
        %v212 = vsel %vm204, %v199, 0.0
        %v213 = vadd.f32 %v211, %v212
        %v214 = vsel %vm204, %v200, 0.0
        %v215 = vadd.f32 %v213, %v214
        %v216 = vsel %vm204, %v201, 0.0
        %v217 = vadd.f32 %v215, %v216
        %v218 = vsel %vm204, %v202, 0.0
        %v219 = vadd.f32 %v217, %v218
        %v220 = vrot.slane %v219, 4
        %v221 = vadd.f32 %v219, %v220
        %v222 = vrot.slane %v221, 2
        %v223 = vadd.f32 %v221, %v222
        %v224 = vrot.slane %v223, 1
        %v225 = vadd.f32 %v223, %v224
        %v226 = vadd.f32 %v203, %v225
        %vm227 = vcmask 253952
        %228 = vst.msk [vmem:[%s180] sm:$0x1] %vm227, %v226
        %v229 = vld [vmem:[%s186] sm:$0x1]
        %v230 = vmul.f32 %v195, %v195
        %v231 = vmul.f32 %v196, %v196
        %v232 = vmul.f32 %v197, %v197
        %v233 = vmul.f32 %v198, %v198
        %v234 = vmul.f32 %v199, %v199
        %v235 = vmul.f32 %v200, %v200
        %v236 = vmul.f32 %v201, %v201
        %v237 = vmul.f32 %v202, %v202
        %v238 = vsel %vm204, %v230, 0.0
        %v239 = vsel %vm204, %v231, 0.0
        %v240 = vadd.f32 %v238, %v239
        %v241 = vsel %vm204, %v232, 0.0
        %v242 = vadd.f32 %v240, %v241
        %v243 = vsel %vm204, %v233, 0.0
        %v244 = vadd.f32 %v242, %v243
        %v245 = vsel %vm204, %v234, 0.0
        %v246 = vadd.f32 %v244, %v245
        %v247 = vsel %vm204, %v235, 0.0
        %v248 = vadd.f32 %v246, %v247
        %v249 = vsel %vm204, %v236, 0.0
        %v250 = vadd.f32 %v248, %v249
        %v251 = vsel %vm204, %v237, 0.0
        %v252 = vadd.f32 %v250, %v251
        %v253 = vrot.slane %v252, 4
        %v254 = vadd.f32 %v252, %v253
        %v255 = vrot.slane %v254, 2
        %v256 = vadd.f32 %v254, %v255
        %v257 = vrot.slane %v256, 1
        %v258 = vadd.f32 %v256, %v257
        %v259 = vadd.f32 %v229, %v258
        %260 = vst.msk [vmem:[%s186] sm:$0x1] %vm227, %v259
        %s261 = sand.u32 %s71, 1
        %s262 = scalar_lea.sflag [#allocation4], %s261
        %s263 = sand.u32 %s71, 1
        %s264 = scalar_lea.vmem [#allocation5], %s263
        %s265 = sand.u32 %s97, 1
        %s266 = scalar_lea.sflag [#allocation7], %s265
        %s267 = sand.u32 %s97, 1
        %s268 = scalar_lea.vmem [#allocation6], %s267
        // Predicated region
        $region33: #{tpu_custom_call.1} parent=23 // pred_check
          %p269 = pneg %p81
        $region34: #{tpu_custom_call.1} parent=23 // pred_check_branch
          %271 = sbr.rel (%p269) target = $region36
        $region35: #{tpu_custom_call.1} parent=23 // pred_region
          %s273 = ssub.s32 16, 16
          %274 = vsyncadd %s262, %s273
          %s275 = smul.addr %s27, 16
          %s276 = scalar_lea.hbm %s1, %s275
          %s278 = sshll.u32 %s264, 4
          %s279 = int_to_ptr.vmem [resolvable:$true] %s278
          %281 = dma.vmem_to_hbm [thread:$0]  %s279, 16, %s276, %s262
        $region36: #{tpu_custom_call.1} parent=23 // pred_fallthru
          _
        // Predicated region
        $region37: #{tpu_custom_call.1} parent=23 // pred_check
          %p282 = pneg %p107
        $region38: #{tpu_custom_call.1} parent=23 // pred_check_branch
          %284 = sbr.rel (%p282) target = $region40
        $region39: #{tpu_custom_call.1} parent=23 // pred_region
          %s286 = ssub.s32 16, 16
          %287 = vsyncadd %s266, %s286
          %s288 = smul.addr %s27, 16
          %s289 = scalar_lea.hbm %s2, %s288
          %s291 = sshll.u32 %s268, 4
          %s292 = int_to_ptr.vmem [resolvable:$true] %s291
          %294 = dma.vmem_to_hbm [thread:$0]  %s292, 16, %s289, %s266
        $region40: #{tpu_custom_call.1} parent=23 // pred_fallthru
          _
      $region24: #{tpu_custom_call.1} parent=5 // pred_fallthru
        _
      %p295 = scmp.le.s32.totalorder 2, %s18
      // Predicated region
      $region41: #{tpu_custom_call.1} parent=5 // pred_check
        %p296 = pneg %p295
      $region42: #{tpu_custom_call.1} parent=5 // pred_check_branch
        %298 = sbr.rel (%p296) target = $region44
      $region43: #{tpu_custom_call.1} parent=5 // pred_region
        %s299 = ssub.s32 %s18, 2
        // Predicated region
        $region45: #{tpu_custom_call.1} parent=43 // pred_check
          %p300 = pneg %p87
        $region46: #{tpu_custom_call.1} parent=43 // pred_check_branch
          %302 = sbr.rel (%p300) target = $region48
        $region47: #{tpu_custom_call.1} parent=43 // pred_region
          %s303 = sand.u32 %s72, 1
          %s304 = scalar_lea.sflag [#allocation4], %s303
          %s305 = sand.u32 %s72, 1
          %s306 = scalar_lea.vmem [#allocation5], %s305
          %307 = dma.done %s304, 16
        $region48: #{tpu_custom_call.1} parent=43 // pred_fallthru
          _
        // Predicated region
        $region49: #{tpu_custom_call.1} parent=43 // pred_check
          %p308 = pneg %p113
        $region50: #{tpu_custom_call.1} parent=43 // pred_check_branch
          %310 = sbr.rel (%p308) target = $region52
        $region51: #{tpu_custom_call.1} parent=43 // pred_region
          %s311 = sand.u32 %s98, 1
          %s312 = scalar_lea.sflag [#allocation7], %s311
          %s313 = sand.u32 %s98, 1
          %s314 = scalar_lea.vmem [#allocation6], %s313
          %315 = dma.done %s312, 16
        $region52: #{tpu_custom_call.1} parent=43 // pred_fallthru
          _
      $region44: #{tpu_custom_call.1} parent=5 // pred_fallthru
        _
    $region6: #{tpu_custom_call.1} parent=1 // loop_footer
      %s22 = sadd.s32 1, %s18
    $region7: #{tpu_custom_call.1} parent=1 // loop_footer_branch
      %17 = sbr.rel target = $region3
    $region8: #{tpu_custom_call.1} parent=1 // loop_exit
      _
    %316 = vsyncpa [#allocation3], 1
    %s317 = scalar_lea.sflag [#allocation3], 1
    %318 = vsyncpa %s317, 1
    %319 = vsyncpa [#allocation4], 1
    %s320 = scalar_lea.sflag [#allocation4], 1
    %321 = vsyncpa %s320, 1
    %322 = vsyncpa [#allocation7], 1
    %s323 = scalar_lea.sflag [#allocation7], 1
    %324 = vsyncpa %s323, 1

</llo_original>
